<compile_context>
chip_gen: v7x
topology: tpu7x:2x2x1
jax: 0.10.0
libtpu: 0.0.40
codegen_flags: <defaults>
</compile_context>

<pallas_src>
import jax
import jax.numpy as jnp
from jax.experimental import pallas as pl
from jax.experimental.pallas import tpu as pltpu

C_LATENT = 16
K_IN = 1280          # efficientnet_v2_s feature channels
BN_EPS = 1e-5        # nn.BatchNorm2d default


def mapper_kernel(w_ref, b_ref, x_ref, o_ref):
    """o[b] = (W*inv_std)[16,1280] @ X[b][1280,m_tile] + (-mean*inv_std)[16,1].

    Bb batch elements per grid step (static unroll), f32 MXU accumulation,
    f32 bias epilogue, cast at the final store.

    NOTE (ragged tiles): when HW % m_tile != 0 or B % Bb != 0 the padded
    lanes/rows of the final block are computed on padded data and masked out on
    store.  This is benign because every output lane depends only on its own
    input column -- do not add a reduction over the lane/batch axes here
    without masking.
    """
    w = w_ref[...]                    # [16, 1280], feature dtype
    b = b_ref[...]                    # [16, 1], f32
    for i in range(x_ref.shape[0]):   # static unroll over Bb
        acc = jnp.dot(w, x_ref[i], preferred_element_type=jnp.float32)
        o_ref[i] = (acc + b).astype(o_ref.dtype)


def _cdiv(a, b):
    return -(-a // b)


def _vmem_capacity_bytes():
    """Per-core VMEM capacity; conservative 64 MiB (v7x) fallback."""
    try:
        info = pltpu.get_tpu_info()
        cap = getattr(info, "vmem_capacity_bytes", None)
        if cap:
            return int(cap)
    except Exception:
        pass
    return 64 * 1024 * 1024


def _select_tiling(B, HW, feat_bytes, vmem_budget_bytes):
    """Pick (Bb, m_tile) so 3x x-slab + 2x out-slab + weights fit the budget."""
    fixed = 2 * (C_LATENT * K_IN + C_LATENT) * 4            # weight+bias (f32 upper bound)
    per_lane = (3 * K_IN + 2 * C_LATENT) * feat_bytes        # bytes per output lane
    lane_budget = max(128, (vmem_budget_bytes - fixed) // per_lane)

    if HW <= lane_budget:
        # Small/moderate spatial extent (the realistic efficientnet case,
        # HW = 49 / 144): take all of HW per step and pack several batch
        # elements per block to amortize the fixed grid-step overhead.
        m_tile = HW
        bb_cap = int(max(1, min(B, lane_budget // max(HW, 1), 32)))
        Bb = _cdiv(B, _cdiv(B, bb_cap))          # balanced batch blocks
    else:
        # Large spatial extent: one batch element per step, balanced
        # multiple-of-128 tiles so the last tile isn't a thin padded remainder.
        Bb = 1
        m_cap = (lane_budget // 128) * 128
        n_tiles = _cdiv(HW, m_cap)
        m_tile = 128 * _cdiv(_cdiv(HW, n_tiles), 128)

    # v7x megacore: guarantee >= 2 grid steps so both TensorCores get work.
    if _cdiv(B, Bb) * _cdiv(HW, m_tile) == 1:
        if B >= 2:
            Bb = _cdiv(B, 2)
        elif HW >= 256:
            m_tile = 128 * _cdiv(_cdiv(HW, 2), 128)
    return Bb, m_tile


def efficientnet_mapper_pallas(feat_nchw, conv_w, running_mean, running_var):
    """feat_nchw: [B, 1280, H, W] backbone features (NCHW, native dtype kept).
       conv_w:    [c_latent, 1280, 1, 1] 1x1-conv weight (no bias).
       returns    [B, c_latent, H, W] (NCHW), same dtype as feat_nchw."""
    B, K, H, W = feat_nchw.shape
    N = conv_w.shape[0]
    assert K == K_IN
    HW = H * W

    # Free reshape (no data movement): NCHW -> [B, K, H*W].
    x = feat_nchw.reshape(B, K, HW)
    feat_bytes = jnp.dtype(x.dtype).itemsize

    # Fold eval-mode BatchNorm2d(affine=False) into the 1x1-conv weight/bias.
    # NOTE: casting the folded weight to the feature dtype quantizes inv_std
    # into bf16 when features are bf16; accumulation stays f32, so deviation
    # from the PyTorch f32 path is ~bf16 epsilon (covered by the bf16 test).
    inv_std = jax.lax.rsqrt(running_var.astype(jnp.float32) + BN_EPS)          # (N,)
    w_folded = (conv_w.reshape(N, K).astype(jnp.float32)
                * inv_std[:, None]).astype(x.dtype)                            # (N, K)
    bias = (-running_mean.astype(jnp.float32) * inv_std).reshape(N, 1)         # (N, 1) f32

    # Generation/dtype-aware tiling and VMEM limit.
    vmem_phys = _vmem_capacity_bytes()
    budget = max(24 << 20, min(vmem_phys // 2, 40 << 20))   # safe on 64 MiB v7x
    Bb, m_tile = _select_tiling(B, HW, feat_bytes, budget)

    x_block = Bb * K * m_tile * feat_bytes
    o_block = Bb * N * m_tile * feat_bytes
    wb_bytes = 2 * (N * K * feat_bytes + N * 4)
    total = 3 * x_block + 2 * o_block + wb_bytes
    vmem_limit = min(max(32 << 20, int(total * 1.25) + (2 << 20)), 112 << 20)

    grid = (_cdiv(B, Bb), _cdiv(HW, m_tile))

    def build(x_pipeline_mode):
        x_kwargs = {} if x_pipeline_mode is None else {"pipeline_mode": x_pipeline_mode}
        return pl.pallas_call(
            mapper_kernel,
            out_shape=jax.ShapeDtypeStruct((B, N, HW), feat_nchw.dtype),
            grid_spec=pltpu.PrefetchScalarGridSpec(
                num_scalar_prefetch=0,
                grid=grid,
                in_specs=[
                    pl.BlockSpec((N, K), lambda b, m: (0, 0)),                 # folded weight
                    pl.BlockSpec((N, 1), lambda b, m: (0, 0)),                 # folded bias (f32)
                    pl.BlockSpec((Bb, K, m_tile), lambda b, m: (b, 0, m),      # NCHW channel slab
                                 **x_kwargs),
                ],
                out_specs=pl.BlockSpec((Bb, N, m_tile), lambda b, m: (b, 0, m)),
            ),
            compiler_params=pltpu.CompilerParams(
                dimension_semantics=("parallel", "parallel"),  # megacore sharding on v7x
                vmem_limit_bytes=vmem_limit,
            ),
        )

    # Triple-buffer the x slab (pipeline is DMA-issue limited); fall back to
    # default double buffering if pipeline_mode isn't supported by this jax.
    buffered = getattr(pl, "Buffered", None)
    if buffered is not None:
        try:
            out = build(buffered(3))(w_folded, bias, x)
        except Exception:
            out = build(None)(w_folded, bias, x)
    else:
        out = build(None)(w_folded, bias, x)

    # [B, N, HW] -> [B, N, H, W]: free reshape, already NCHW.
    return out.reshape(B, N, H, W)


if __name__ == "__main__":
    key = jax.random.PRNGKey(0)
    k_feat, k_w, k_mean, k_var, k_feat2 = jax.random.split(key, 5)

    # Deterministic synthetic mapper parameters (shapes from __init__).
    conv_w = 0.02 * jax.random.normal(k_w, (C_LATENT, K_IN, 1, 1), dtype=jnp.float32)
    running_mean = 0.1 * jax.random.normal(k_mean, (C_LATENT,), dtype=jnp.float32)
    running_var = jax.random.uniform(k_var, (C_LATENT,), minval=0.5, maxval=1.5,
                                     dtype=jnp.float32)

    def reference(feat):
        """Pure-JAX mapper reference (1x1 conv + eval BatchNorm, affine=False)."""
        Bx, _, Hx, Wx = feat.shape
        rows = jnp.transpose(feat.astype(jnp.float32), (0, 2, 3, 1)).reshape(-1, K_IN)
        r = rows @ conv_w.reshape(C_LATENT, K_IN).T
        r = (r - running_mean[None, :]) / jnp.sqrt(running_var[None, :] + BN_EPS)
        return jnp.transpose(r.reshape(Bx, Hx, Wx, C_LATENT), (0, 3, 1, 2))

    # Test 1: f32 features, HW a multiple of 128 (lane-dense tiles).
    B, H, W = 2, 16, 16
    feat = jax.random.normal(k_feat, (B, K_IN, H, W), dtype=jnp.float32)
    y = jax.block_until_ready(
        efficientnet_mapper_pallas(feat, conv_w, running_mean, running_var))
    assert y.shape == (B, C_LATENT, H, W) and y.dtype == feat.dtype
    assert jnp.allclose(y, reference(feat), atol=2e-4, rtol=2e-4)

    # Test 2: bf16 features at the realistic 224px efficientnet_v2_s output
    # shape (HW = 7*7 = 49 < 128): exercises the multi-batch-per-step path and
    # the bf16-folded-weight quantization tolerance.
    B2, H2, W2 = 3, 7, 7
    feat2 = jax.random.normal(k_feat2, (B2, K_IN, H2, W2),
                              dtype=jnp.float32).astype(jnp.bfloat16)
    y2 = jax.block_until_ready(
        efficientnet_mapper_pallas(feat2, conv_w, running_mean, running_var))
    assert y2.shape == (B2, C_LATENT, H2, W2) and y2.dtype == jnp.bfloat16
    assert jnp.allclose(y2.astype(jnp.float32), reference(feat2), atol=6e-2, rtol=6e-2)

    print("KERNEL_OK")
</pallas_src>

<mosaic_0001>
module attributes {stable_mosaic.version = 11 : i64} {
  func.func @mapper_kernel(%arg0: i32, %arg1: i32, %arg2: memref<16x1280xf32, #tpu.memory_space<vmem>>, %arg3: memref<16x1xf32, #tpu.memory_space<vmem>>, %arg4: memref<1x1280x256xf32, #tpu.memory_space<vmem>>, %arg5: memref<1x16x256xf32, #tpu.memory_space<vmem>>) attributes {dimension_semantics = [#tpu.dimension_semantics<parallel>, #tpu.dimension_semantics<parallel>], iteration_bounds = array<i64: 2, 1>, scalar_prefetch = 0 : i64, scratch_operands = 0 : i64, tpu.core_type = #tpu.core_type<tc>, window_params = [{pipeline_mode = #tpu.pipeline_mode<synchronous>, transform_indices = @transform_0, window_bounds = array<i64: 16, 1280>}, {pipeline_mode = #tpu.pipeline_mode<synchronous>, transform_indices = @transform_1, window_bounds = array<i64: 16, 1>}, {transform_indices = @transform_2, window_bounds = array<i64: 1, 1280, 256>}, {transform_indices = @transform_3, window_bounds = array<i64: 1, 16, 256>}]} {
    %c0 = arith.constant 0 : index
    %c0_0 = arith.constant 0 : index
    %0 = vector.load %arg2[%c0, %c0_0] : memref<16x1280xf32, #tpu.memory_space<vmem>>, vector<16x1280xf32>
    %c0_1 = arith.constant 0 : index
    %c0_2 = arith.constant 0 : index
    %1 = vector.load %arg3[%c0_1, %c0_2] : memref<16x1xf32, #tpu.memory_space<vmem>>, vector<16x1xf32>
    %c0_3 = arith.constant 0 : index
    %c0_4 = arith.constant 0 : index
    %c0_5 = arith.constant 0 : index
    %2 = vector.load %arg4[%c0_3, %c0_4, %c0_5] : memref<1x1280x256xf32, #tpu.memory_space<vmem>>, vector<1x1280x256xf32>
    %3 = vector.shape_cast %2 : vector<1x1280x256xf32> to vector<1280x256xf32>
    %cst = arith.constant dense<0.000000e+00> : vector<16x256xf32>
    %4 = tpu.matmul %0, %3, %cst {dimension_numbers = #tpu.dot_dimension_numbers<[1], [0], [0], [1], [0, 0, 1, 1], [], []>} : vector<16x1280xf32>, vector<1280x256xf32>, vector<16x256xf32> -> vector<16x256xf32>
    %5 = vector.broadcast %1 : vector<16x1xf32> to vector<16x256xf32>
    %6 = arith.addf %4, %5 : vector<16x256xf32>
    %c0_6 = arith.constant 0 : index
    %c0_7 = arith.constant 0 : index
    %c0_8 = arith.constant 0 : index
    %7 = vector.load %arg5[%c0_6, %c0_7, %c0_8] : memref<1x16x256xf32, #tpu.memory_space<vmem>>, vector<1x16x256xf32>
    %8 = vector.shape_cast %7 : vector<1x16x256xf32> to vector<16x256xf32>
    %9 = vector.shape_cast %6 : vector<16x256xf32> to vector<1x16x256xf32>
    tpu.vector_store %arg5[%c0_6, %c0_7, %c0_8], %9 {strides = array<i32>} : memref<1x16x256xf32, #tpu.memory_space<vmem>>, vector<1x16x256xf32>,
    return
  }
  func.func @transform_0(%arg0: i32, %arg1: i32) -> (i32, i32) {
    %c0_i32 = arith.constant 0 : i32
    %c0_i32_0 = arith.constant 0 : i32
    %c0_i32_1 = arith.constant 0 : i32
    return %c0_i32, %c0_i32_0 : i32, i32
  }
  func.func @transform_1(%arg0: i32, %arg1: i32) -> (i32, i32) {
    %c0_i32 = arith.constant 0 : i32
    %c0_i32_0 = arith.constant 0 : i32
    %c0_i32_1 = arith.constant 0 : i32
    return %c0_i32, %c0_i32_0 : i32, i32
  }
  func.func @transform_2(%arg0: i32, %arg1: i32) -> (i32, i32, i32) {
    %c0_i32 = arith.constant 0 : i32
    %c0_i32_0 = arith.constant 0 : i32
    return %arg0, %c0_i32, %arg1 : i32, i32, i32
  }
  func.func @transform_3(%arg0: i32, %arg1: i32) -> (i32, i32, i32) {
    %c0_i32 = arith.constant 0 : i32
    %c0_i32_0 = arith.constant 0 : i32
    return %arg0, %c0_i32, %arg1 : i32, i32, i32
  }
}

</mosaic_0001>

<llo_original>
// kernel: tpu_custom_call.1
$region0: #{tpu_custom_call.1}
  #allocation0 [shape = 'u32[]', space=smem, size = 0x4, offset = 0x4, fixed_abs, tag = 'smem constant byte address 0x4 - core index']
  #allocation1 [shape = 'u32[144,128]{1,0:T(1,128)}', space=vmem, size = 0x12000, scoped, tag = 'internal scratch']
  %s0 = inlined_call_operand.hbm [shape: f32[16,1280], index: 0, kind: input, shape index: {}]
  %s1 = inlined_call_operand.vmem [shape: f32[16,1], index: 1, kind: input, shape index: {}]
  %s2 = inlined_call_operand.hbm [shape: f32[2,1280,256], index: 2, kind: input, shape index: {}]
  %s3 = inlined_call_operand.hbm [shape: f32[2,16,256], index: 3, kind: output, shape index: {}]
  %s4 = sld [smem:[#allocation0]]
  $region53: #{tpu_custom_call.1} parent=0
    _
  %s6 = ssub.s32 1, %s4
  %s7 = scalar_select 0, %s6, %s4
  $region1: #{tpu_custom_call.1} parent=0
    #allocation2 [shape = 'u8[81920]{0}', space=vmem, size = 0x14000, scoped, tag = 'input window, operand 0, single buffered']
    #allocation3 [shape = 's32[2]{0}', space=sflag, size = 0x8, scoped, tag = 'scoped memory for tpu_custom_call.1']
    #allocation4 [shape = 's32[2]{0}', space=sflag, size = 0x8, scoped, tag = 'scoped memory for tpu_custom_call.1']
    #allocation5 [shape = 'u8[2621440]{0}', space=vmem, size = 0x280000, scoped, tag = 'input window, operand 2']
    #allocation6 [shape = 's32[2]{0}', space=sflag, size = 0x8, scoped, tag = 'scoped memory for tpu_custom_call.1']
    #allocation7 [shape = 'u8[32768]{0}', space=vmem, size = 0x8000, scoped, tag = 'output window, operand 0']
    %8 = vsyncpa [#allocation3], 0
    %9 = vsyncpa [#allocation6], 0
    %s10 = scalar_lea.sflag [#allocation6], 1
    %11 = vsyncpa %s10, 0
    %12 = vsyncpa [#allocation4], 0
    %s13 = scalar_lea.sflag [#allocation4], 1
    %14 = vsyncpa %s13, 0
    loop: start=0, step=1, limit=4
    $region2: #{tpu_custom_call.1} parent=1 // loop_pre_header
      _
    $region3: #{tpu_custom_call.1} parent=1 // loop_header
      %s16 = sphi 0, %s20
      %p17 = scmp.ge.s32.totalorder %s16, 4
      %s23 = sphi 0, %s35
      %s24 = sphi 0, %s31
      %s25 = sphi 0, %s23
      %s26 = sphi 0, %s24
      %s27 = sphi 0, %s25
      %s28 = sphi 0, %s26
      %s36 = sphi 0, %s36
      %s38 = sphi 0, %s36
      %s39 = sphi 0, %s38
      %s53 = sphi 0, %s39
      %s57 = sphi 0, %s57
      %s59 = sphi 0, %s57
      %s60 = sphi 0, %s59
      %s74 = sphi 0, %s60
      %s82 = sphi 0, %s84
      %s85 = sphi 0, %s82
      %s86 = sphi 0, %s85
      %s102 = sphi 0, %s86
      %s110 = sphi 0, %s112
      %s113 = sphi 0, %s110
      %s114 = sphi 0, %s113
      %s130 = sphi 0, %s114
    $region4: #{tpu_custom_call.1} parent=1 // loop_header_branch
      %19 = sbr.rel (%p17) target = $region8
    $region5: #{tpu_custom_call.1} parent=1 // loop_body
      %s21 = ssub.s32 %s16, 1
      %s22 = ssub.s32 %s16, 2
      %s29 = sadd.s32 1, %s24
      %p30 = scmp.ge.s32.totalorder %s29, 1
      %s31 = scalar_select %p30, 0, %s29
      %s32 = sadd.s32 1, %s23
      %s33 = scalar_select %p30, %s32, %s23
      %p34 = scmp.ge.s32.totalorder %s33, 2
      %s35 = scalar_select %p34, 0, %s33
      %s37 = sadd.s32 %s36, 1
      %p40 = scmp.eq.s32.totalorder %s16, 1
      %p41 = scmp.ne.s32.totalorder %s36, %s38
      %p42 = scmp.eq.s32.totalorder %s16, 0
      %p43 = por %p41, %p42
      %p44 = scmp.ne.s32.totalorder %s36, %s38
      %p45 = scmp.eq.s32.totalorder %s21, 1
      %p46 = por %p44, %p45
      %p47 = scmp.ne.s32.totalorder %s38, %s39
      %p48 = scmp.eq.s32.totalorder %s21, 0
      %p49 = por %p47, %p48
      %p50 = scmp.ne.s32.totalorder %s38, %s39
      %p51 = scmp.eq.s32.totalorder %s22, 1
      %p52 = por %p50, %p51
      %p54 = scmp.ne.s32.totalorder %s39, %s53
      %p55 = scmp.eq.s32.totalorder %s22, 0
      %p56 = por %p54, %p55
      %s58 = sadd.s32 %s57, 1
      %p61 = scmp.eq.s32.totalorder %s16, 1
      %p62 = scmp.ne.s32.totalorder %s57, %s59
      %p63 = scmp.eq.s32.totalorder %s16, 0
      %p64 = por %p62, %p63
      %p65 = scmp.ne.s32.totalorder %s57, %s59
      %p66 = scmp.eq.s32.totalorder %s21, 1
      %p67 = por %p65, %p66
      %p68 = scmp.ne.s32.totalorder %s59, %s60
      %p69 = scmp.eq.s32.totalorder %s21, 0
      %p70 = por %p68, %p69
      %p71 = scmp.ne.s32.totalorder %s59, %s60
      %p72 = scmp.eq.s32.totalorder %s22, 1
      %p73 = por %p71, %p72
      %p75 = scmp.ne.s32.totalorder %s60, %s74
      %p76 = scmp.eq.s32.totalorder %s22, 0
      %p77 = por %p75, %p76
      %s78 = ssub.s32 %s23, %s35
      %s79 = ssub.s32 %s24, %s31
      %s80 = sor.u32 %s78, %s79
      %p81 = scmp.eq.s32.totalorder %s80, 0
      %s83 = sadd.s32 %s82, 1
      %s84 = scalar_select %p81, %s82, %s83
      %p87 = pneg %p81
      %p88 = scmp.eq.s32.totalorder %s16, 1
      %p89 = por %p87, %p88
      %p90 = scmp.ne.s32.totalorder %s82, %s85
      %p91 = scmp.eq.s32.totalorder %s16, 0
      %p92 = por %p90, %p91
      %p93 = scmp.ne.s32.totalorder %s82, %s85
      %p94 = scmp.eq.s32.totalorder %s21, 1
      %p95 = por %p93, %p94
      %p96 = scmp.ne.s32.totalorder %s85, %s86
      %p97 = scmp.eq.s32.totalorder %s21, 0
      %p98 = por %p96, %p97
      %p99 = scmp.ne.s32.totalorder %s85, %s86
      %p100 = scmp.eq.s32.totalorder %s22, 1
      %p101 = por %p99, %p100
      %p103 = scmp.ne.s32.totalorder %s86, %s102
      %p104 = scmp.eq.s32.totalorder %s22, 0
      %p105 = por %p103, %p104
      %s106 = ssub.s32 %s23, %s35
      %s107 = ssub.s32 %s24, %s31
      %s108 = sor.u32 %s106, %s107
      %p109 = scmp.eq.s32.totalorder %s108, 0
      %s111 = sadd.s32 %s110, 1
      %s112 = scalar_select %p109, %s110, %s111
      %p115 = pneg %p109
      %p116 = scmp.eq.s32.totalorder %s16, 1
      %p117 = por %p115, %p116
      %p118 = scmp.ne.s32.totalorder %s110, %s113
      %p119 = scmp.eq.s32.totalorder %s16, 0
      %p120 = por %p118, %p119
      %p121 = scmp.ne.s32.totalorder %s110, %s113
      %p122 = scmp.eq.s32.totalorder %s21, 1
      %p123 = por %p121, %p122
      %p124 = scmp.ne.s32.totalorder %s113, %s114
      %p125 = scmp.eq.s32.totalorder %s21, 0
      %p126 = por %p124, %p125
      %p127 = scmp.ne.s32.totalorder %s113, %s114
      %p128 = scmp.eq.s32.totalorder %s22, 1
      %p129 = por %p127, %p128
      %p131 = scmp.ne.s32.totalorder %s114, %s130
      %p132 = scmp.eq.s32.totalorder %s22, 0
      %p133 = por %p131, %p132
      %p134 = scmp.le.s32.totalorder 1, %s16
      %p135 = scmp.lt.s32.totalorder %s16, 3
      %p136 = pnand %p134, %p135
      %p137 = pneg %p136
      // Predicated region
      $region9: #{tpu_custom_call.1} parent=5 // pred_check
        _
      $region10: #{tpu_custom_call.1} parent=5 // pred_check_branch
        %139 = sbr.rel (%p136) target = $region12
      $region11: #{tpu_custom_call.1} parent=5 // pred_region
        %s140 = ssub.s32 %s16, 1
        // Predicated region
        $region13: #{tpu_custom_call.1} parent=11 // pred_check
          %p141 = pneg %p49
        $region14: #{tpu_custom_call.1} parent=11 // pred_check_branch
          %143 = sbr.rel (%p141) target = $region16
        $region15: #{tpu_custom_call.1} parent=11 // pred_region
          %s145 = ssub.s32 2560, 2560
          %146 = vsyncadd [#allocation3], %s145
          %s147 = sshll.u32 [#allocation2], 4
          %s148 = int_to_ptr.vmem [resolvable:$true] %s147
          %153 = dma.hbm_to_vmem [thread:$0]  %s0, 2560, %s148, [#allocation3], 1280, 1280, 80
        $region16: #{tpu_custom_call.1} parent=11 // pred_fallthru
          _
        // Predicated region
        $region17: #{tpu_custom_call.1} parent=11 // pred_check
          %p154 = pneg %p70
        $region18: #{tpu_custom_call.1} parent=11 // pred_check_branch
          %156 = sbr.rel (%p154) target = $region20
        $region19: #{tpu_custom_call.1} parent=11 // pred_region
          _
        $region20: #{tpu_custom_call.1} parent=11 // pred_fallthru
          _
      $region12: #{tpu_custom_call.1} parent=5 // pred_fallthru
        _
      %p157 = scmp.lt.s32.totalorder %s16, 2
      // Predicated region
      $region21: #{tpu_custom_call.1} parent=5 // pred_check
        %p158 = pneg %p157
      $region22: #{tpu_custom_call.1} parent=5 // pred_check_branch
        %160 = sbr.rel (%p158) target = $region24
      $region23: #{tpu_custom_call.1} parent=5 // pred_region
        // Predicated region
        $region25: #{tpu_custom_call.1} parent=23 // pred_check
          %p161 = pneg %p92
        $region26: #{tpu_custom_call.1} parent=23 // pred_check_branch
          %163 = sbr.rel (%p161) target = $region28
        $region27: #{tpu_custom_call.1} parent=23 // pred_region
          %s164 = sand.u32 %s82, 1
          %s165 = scalar_lea.sflag [#allocation6], %s164
          %s166 = sand.u32 %s82, 1
          %s167 = smul.addr %s166, 2560
          %s168 = scalar_lea.vmem [#allocation5], %s167
          %s169 = smul.u32 2, %s24
          %s171 = ssub.s32 40960, 40960
          %172 = vsyncadd %s165, %s171
          %s173 = smul.addr %s23, 320
          %s174 = sadd.s32 %s169, %s173
          %s175 = smul.addr %s174, 128
          %s176 = scalar_lea.hbm %s2, %s175
          %s177 = sshll.u32 %s168, 4
          %s178 = int_to_ptr.vmem [resolvable:$true] %s177
          %183 = dma.hbm_to_vmem [thread:$0]  %s176, 40960, %s178, %s165, 256, 256, 16
        $region28: #{tpu_custom_call.1} parent=23 // pred_fallthru
          _
      $region24: #{tpu_custom_call.1} parent=5 // pred_fallthru
        _
      %p184 = scmp.le.s32.totalorder 1, %s16
      %p185 = scmp.lt.s32.totalorder %s16, 3
      %p186 = pnand %p184, %p185
      %p187 = pneg %p186
      // Predicated region
      $region29: #{tpu_custom_call.1} parent=5 // pred_check
        _
      $region30: #{tpu_custom_call.1} parent=5 // pred_check_branch
        %189 = sbr.rel (%p186) target = $region32
      $region31: #{tpu_custom_call.1} parent=5 // pred_region
        %s190 = ssub.s32 %s16, 1
        // Predicated region
        $region33: #{tpu_custom_call.1} parent=31 // pred_check
          %p191 = pneg %p49
        $region34: #{tpu_custom_call.1} parent=31 // pred_check_branch
          %193 = sbr.rel (%p191) target = $region36
        $region35: #{tpu_custom_call.1} parent=31 // pred_region
          %194 = dma.done [#allocation3], 2560
        $region36: #{tpu_custom_call.1} parent=31 // pred_fallthru
          _
        %s195 = sand.u32 %s85, 1
        %s196 = scalar_lea.sflag [#allocation6], %s195
        %s197 = sand.u32 %s85, 1
        %s198 = smul.addr %s197, 2560
        %s199 = scalar_lea.vmem [#allocation5], %s198
        // Predicated region
        $region37: #{tpu_custom_call.1} parent=31 // pred_check
          %p200 = pneg %p98
        $region38: #{tpu_custom_call.1} parent=31 // pred_check_branch
          %202 = sbr.rel (%p200) target = $region40
        $region39: #{tpu_custom_call.1} parent=31 // pred_region
          %203 = dma.done %s196, 40960
        $region40: #{tpu_custom_call.1} parent=31 // pred_fallthru
          _
        %p204 = pneg %p49
        %p205 = pneg %p46
        %p206 = pneg %p70
        %p207 = pneg %p67
        %s208 = sand.u32 %s85, 1
        %s209 = scalar_lea.sflag [#allocation6], %s208
        %s210 = sand.u32 %s85, 1
        %s211 = smul.addr %s210, 2560
        %s212 = scalar_lea.vmem [#allocation5], %s211
        %p213 = pneg %p98
        %p214 = pneg %p95
        %p215 = pneg %p126
        %p216 = pneg %p123
        %s217 = sand.u32 %s113, 1
        %s218 = scalar_lea.sflag [#allocation4], %s217
        %s219 = sand.u32 %s113, 1
        %s220 = smul.addr %s219, 32
        %s221 = scalar_lea.vmem [#allocation7], %s220
        %s222 = smul.u32 2, %s26
        %s223 = smul.u32 2, %s26
        %v224 = vld [vmem:[#allocation2] sm:$0xff]
        %v225 = vld [vmem:[#allocation2 + $0x8] sm:$0xff]
        %v226 = vld [vmem:[#allocation2 + $0x10] sm:$0xff]
        %v227 = vld [vmem:[#allocation2 + $0x18] sm:$0xff]
        %v228 = vld [vmem:[#allocation2 + $0x20] sm:$0xff]
        %v229 = vld [vmem:[#allocation2 + $0x28] sm:$0xff]
        %v230 = vld [vmem:[#allocation2 + $0x30] sm:$0xff]
        %v231 = vld [vmem:[#allocation2 + $0x38] sm:$0xff]
        %v232 = vld [vmem:[#allocation2 + $0x40] sm:$0xff]
        %v233 = vld [vmem:[#allocation2 + $0x48] sm:$0xff]
        %v234 = vld [vmem:[#allocation2 + $0x50] sm:$0xff]
        %v235 = vld [vmem:[#allocation2 + $0x58] sm:$0xff]
        %v236 = vld [vmem:[#allocation2 + $0x60] sm:$0xff]
        %v237 = vld [vmem:[#allocation2 + $0x68] sm:$0xff]
        %v238 = vld [vmem:[#allocation2 + $0x70] sm:$0xff]
        %v239 = vld [vmem:[#allocation2 + $0x78] sm:$0xff]
        %v240 = vld [vmem:[#allocation2 + $0x80] sm:$0xff]
        %v241 = vld [vmem:[#allocation2 + $0x88] sm:$0xff]
        %v242 = vld [vmem:[#allocation2 + $0x90] sm:$0xff]
        %v243 = vld [vmem:[#allocation2 + $0x98] sm:$0xff]
        %v244 = vld [vmem:[%s1] sm:$0xff]
        %v245 = vld [vmem:[%s1 + $0x8] sm:$0xff]
        %v246 = vld [vmem:[%s199] sm:$0xff]
        %v247 = vld [vmem:[%s199 + $0x8] sm:$0xff]
        %v248 = vld [vmem:[%s199 + $0x10] sm:$0xff]
        %v249 = vld [vmem:[%s199 + $0x18] sm:$0xff]
        %v250 = vld [vmem:[%s199 + $0x20] sm:$0xff]
        %v251 = vld [vmem:[%s199 + $0x28] sm:$0xff]
        %v252 = vld [vmem:[%s199 + $0x30] sm:$0xff]
        %v253 = vld [vmem:[%s199 + $0x38] sm:$0xff]
        %v254 = vld [vmem:[%s199 + $0x40] sm:$0xff]
        %v255 = vld [vmem:[%s199 + $0x48] sm:$0xff]
        %v256 = vld [vmem:[%s199 + $0x50] sm:$0xff]
        %v257 = vld [vmem:[%s199 + $0x58] sm:$0xff]
        %v258 = vld [vmem:[%s199 + $0x60] sm:$0xff]
        %v259 = vld [vmem:[%s199 + $0x68] sm:$0xff]
        %v260 = vld [vmem:[%s199 + $0x70] sm:$0xff]
        %v261 = vld [vmem:[%s199 + $0x78] sm:$0xff]
        %v262 = vld [vmem:[%s199 + $0x80] sm:$0xff]
        %v263 = vld [vmem:[%s199 + $0x88] sm:$0xff]
        %v264 = vld [vmem:[%s199 + $0x90] sm:$0xff]
        %v265 = vld [vmem:[%s199 + $0x98] sm:$0xff]
        %v266 = vld [vmem:[%s199 + $0xa0] sm:$0xff]
        %v267 = vld [vmem:[%s199 + $0xa8] sm:$0xff]
        %v268 = vld [vmem:[%s199 + $0xb0] sm:$0xff]
        %v269 = vld [vmem:[%s199 + $0xb8] sm:$0xff]
        %v270 = vld [vmem:[%s199 + $0xc0] sm:$0xff]
        %v271 = vld [vmem:[%s199 + $0xc8] sm:$0xff]
        %v272 = vld [vmem:[%s199 + $0xd0] sm:$0xff]
        %v273 = vld [vmem:[%s199 + $0xd8] sm:$0xff]
        %v274 = vld [vmem:[%s199 + $0xe0] sm:$0xff]
        %v275 = vld [vmem:[%s199 + $0xe8] sm:$0xff]
        %v276 = vld [vmem:[%s199 + $0xf0] sm:$0xff]
        %v277 = vld [vmem:[%s199 + $0xf8] sm:$0xff]
        %v278 = vld [vmem:[%s199 + $0x100] sm:$0xff]
        %v279 = vld [vmem:[%s199 + $0x108] sm:$0xff]
        %v280 = vld [vmem:[%s199 + $0x110] sm:$0xff]
        %v281 = vld [vmem:[%s199 + $0x118] sm:$0xff]
        %v282 = vld [vmem:[%s199 + $0x120] sm:$0xff]
        %v283 = vld [vmem:[%s199 + $0x128] sm:$0xff]
        %v284 = vld [vmem:[%s199 + $0x130] sm:$0xff]
        %v285 = vld [vmem:[%s199 + $0x138] sm:$0xff]
        %v286 = vld [vmem:[%s199 + $0x140] sm:$0xff]
        %v287 = vld [vmem:[%s199 + $0x148] sm:$0xff]
        %v288 = vld [vmem:[%s199 + $0x150] sm:$0xff]
        %v289 = vld [vmem:[%s199 + $0x158] sm:$0xff]
        %v290 = vld [vmem:[%s199 + $0x160] sm:$0xff]
        %v291 = vld [vmem:[%s199 + $0x168] sm:$0xff]
        %v292 = vld [vmem:[%s199 + $0x170] sm:$0xff]
        %v293 = vld [vmem:[%s199 + $0x178] sm:$0xff]
        %v294 = vld [vmem:[%s199 + $0x180] sm:$0xff]
        %v295 = vld [vmem:[%s199 + $0x188] sm:$0xff]
        %v296 = vld [vmem:[%s199 + $0x190] sm:$0xff]
        %v297 = vld [vmem:[%s199 + $0x198] sm:$0xff]
        %v298 = vld [vmem:[%s199 + $0x1a0] sm:$0xff]
        %v299 = vld [vmem:[%s199 + $0x1a8] sm:$0xff]
        %v300 = vld [vmem:[%s199 + $0x1b0] sm:$0xff]
        %v301 = vld [vmem:[%s199 + $0x1b8] sm:$0xff]
        %v302 = vld [vmem:[%s199 + $0x1c0] sm:$0xff]
        %v303 = vld [vmem:[%s199 + $0x1c8] sm:$0xff]
        %v304 = vld [vmem:[%s199 + $0x1d0] sm:$0xff]
        %v305 = vld [vmem:[%s199 + $0x1d8] sm:$0xff]
        %v306 = vld [vmem:[%s199 + $0x1e0] sm:$0xff]
        %v307 = vld [vmem:[%s199 + $0x1e8] sm:$0xff]
        %v308 = vld [vmem:[%s199 + $0x1f0] sm:$0xff]
        %v309 = vld [vmem:[%s199 + $0x1f8] sm:$0xff]
        %v310 = vld [vmem:[%s199 + $0x200] sm:$0xff]
        %v311 = vld [vmem:[%s199 + $0x208] sm:$0xff]
        %v312 = vld [vmem:[%s199 + $0x210] sm:$0xff]
        %v313 = vld [vmem:[%s199 + $0x218] sm:$0xff]
        %v314 = vld [vmem:[%s199 + $0x220] sm:$0xff]
        %v315 = vld [vmem:[%s199 + $0x228] sm:$0xff]
        %v316 = vld [vmem:[%s199 + $0x230] sm:$0xff]
        %v317 = vld [vmem:[%s199 + $0x238] sm:$0xff]
        %v318 = vld [vmem:[%s199 + $0x240] sm:$0xff]
        %v319 = vld [vmem:[%s199 + $0x248] sm:$0xff]
        %v320 = vld [vmem:[%s199 + $0x250] sm:$0xff]
        %v321 = vld [vmem:[%s199 + $0x258] sm:$0xff]
        %v322 = vld [vmem:[%s199 + $0x260] sm:$0xff]
        %v323 = vld [vmem:[%s199 + $0x268] sm:$0xff]
        %v324 = vld [vmem:[%s199 + $0x270] sm:$0xff]
        %v325 = vld [vmem:[%s199 + $0x278] sm:$0xff]
        %v326 = vld [vmem:[%s199 + $0x280] sm:$0xff]
        %v327 = vld [vmem:[%s199 + $0x288] sm:$0xff]
        %v328 = vld [vmem:[%s199 + $0x290] sm:$0xff]
        %v329 = vld [vmem:[%s199 + $0x298] sm:$0xff]
        %v330 = vld [vmem:[%s199 + $0x2a0] sm:$0xff]
        %v331 = vld [vmem:[%s199 + $0x2a8] sm:$0xff]
        %v332 = vld [vmem:[%s199 + $0x2b0] sm:$0xff]
        %v333 = vld [vmem:[%s199 + $0x2b8] sm:$0xff]
        %v334 = vld [vmem:[%s199 + $0x2c0] sm:$0xff]
        %v335 = vld [vmem:[%s199 + $0x2c8] sm:$0xff]
        %v336 = vld [vmem:[%s199 + $0x2d0] sm:$0xff]
        %v337 = vld [vmem:[%s199 + $0x2d8] sm:$0xff]
        %v338 = vld [vmem:[%s199 + $0x2e0] sm:$0xff]
        %v339 = vld [vmem:[%s199 + $0x2e8] sm:$0xff]
        %v340 = vld [vmem:[%s199 + $0x2f0] sm:$0xff]
        %v341 = vld [vmem:[%s199 + $0x2f8] sm:$0xff]
        %v342 = vld [vmem:[%s199 + $0x300] sm:$0xff]
        %v343 = vld [vmem:[%s199 + $0x308] sm:$0xff]
        %v344 = vld [vmem:[%s199 + $0x310] sm:$0xff]
        %v345 = vld [vmem:[%s199 + $0x318] sm:$0xff]
        %v346 = vld [vmem:[%s199 + $0x320] sm:$0xff]
        %v347 = vld [vmem:[%s199 + $0x328] sm:$0xff]
        %v348 = vld [vmem:[%s199 + $0x330] sm:$0xff]
        %v349 = vld [vmem:[%s199 + $0x338] sm:$0xff]
        %v350 = vld [vmem:[%s199 + $0x340] sm:$0xff]
        %v351 = vld [vmem:[%s199 + $0x348] sm:$0xff]
        %v352 = vld [vmem:[%s199 + $0x350] sm:$0xff]
        %v353 = vld [vmem:[%s199 + $0x358] sm:$0xff]
        %v354 = vld [vmem:[%s199 + $0x360] sm:$0xff]
        %v355 = vld [vmem:[%s199 + $0x368] sm:$0xff]
        %v356 = vld [vmem:[%s199 + $0x370] sm:$0xff]
        %v357 = vld [vmem:[%s199 + $0x378] sm:$0xff]
        %v358 = vld [vmem:[%s199 + $0x380] sm:$0xff]
        %v359 = vld [vmem:[%s199 + $0x388] sm:$0xff]
        %v360 = vld [vmem:[%s199 + $0x390] sm:$0xff]
        %v361 = vld [vmem:[%s199 + $0x398] sm:$0xff]
        %v362 = vld [vmem:[%s199 + $0x3a0] sm:$0xff]
        %v363 = vld [vmem:[%s199 + $0x3a8] sm:$0xff]
        %v364 = vld [vmem:[%s199 + $0x3b0] sm:$0xff]
        %v365 = vld [vmem:[%s199 + $0x3b8] sm:$0xff]
        %v366 = vld [vmem:[%s199 + $0x3c0] sm:$0xff]
        %v367 = vld [vmem:[%s199 + $0x3c8] sm:$0xff]
        %v368 = vld [vmem:[%s199 + $0x3d0] sm:$0xff]
        %v369 = vld [vmem:[%s199 + $0x3d8] sm:$0xff]
        %v370 = vld [vmem:[%s199 + $0x3e0] sm:$0xff]
        %v371 = vld [vmem:[%s199 + $0x3e8] sm:$0xff]
        %v372 = vld [vmem:[%s199 + $0x3f0] sm:$0xff]
        %v373 = vld [vmem:[%s199 + $0x3f8] sm:$0xff]
        %v374 = vld [vmem:[%s199 + $0x400] sm:$0xff]
        %v375 = vld [vmem:[%s199 + $0x408] sm:$0xff]
        %v376 = vld [vmem:[%s199 + $0x410] sm:$0xff]
        %v377 = vld [vmem:[%s199 + $0x418] sm:$0xff]
        %v378 = vld [vmem:[%s199 + $0x420] sm:$0xff]
        %v379 = vld [vmem:[%s199 + $0x428] sm:$0xff]
        %v380 = vld [vmem:[%s199 + $0x430] sm:$0xff]
        %v381 = vld [vmem:[%s199 + $0x438] sm:$0xff]
        %v382 = vld [vmem:[%s199 + $0x440] sm:$0xff]
        %v383 = vld [vmem:[%s199 + $0x448] sm:$0xff]
        %v384 = vld [vmem:[%s199 + $0x450] sm:$0xff]
        %v385 = vld [vmem:[%s199 + $0x458] sm:$0xff]
        %v386 = vld [vmem:[%s199 + $0x460] sm:$0xff]
        %v387 = vld [vmem:[%s199 + $0x468] sm:$0xff]
        %v388 = vld [vmem:[%s199 + $0x470] sm:$0xff]
        %v389 = vld [vmem:[%s199 + $0x478] sm:$0xff]
        %v390 = vld [vmem:[%s199 + $0x480] sm:$0xff]
        %v391 = vld [vmem:[%s199 + $0x488] sm:$0xff]
        %v392 = vld [vmem:[%s199 + $0x490] sm:$0xff]
        %v393 = vld [vmem:[%s199 + $0x498] sm:$0xff]
        %v394 = vld [vmem:[%s199 + $0x4a0] sm:$0xff]
        %v395 = vld [vmem:[%s199 + $0x4a8] sm:$0xff]
        %v396 = vld [vmem:[%s199 + $0x4b0] sm:$0xff]
        %v397 = vld [vmem:[%s199 + $0x4b8] sm:$0xff]
        %v398 = vld [vmem:[%s199 + $0x4c0] sm:$0xff]
        %v399 = vld [vmem:[%s199 + $0x4c8] sm:$0xff]
        %v400 = vld [vmem:[%s199 + $0x4d0] sm:$0xff]
        %v401 = vld [vmem:[%s199 + $0x4d8] sm:$0xff]
        %v402 = vld [vmem:[%s199 + $0x4e0] sm:$0xff]
        %v403 = vld [vmem:[%s199 + $0x4e8] sm:$0xff]
        %v404 = vld [vmem:[%s199 + $0x4f0] sm:$0xff]
        %v405 = vld [vmem:[%s199 + $0x4f8] sm:$0xff]
        %v406 = vld [vmem:[%s199 + $0x500] sm:$0xff]
        %v407 = vld [vmem:[%s199 + $0x508] sm:$0xff]
        %v408 = vld [vmem:[%s199 + $0x510] sm:$0xff]
        %v409 = vld [vmem:[%s199 + $0x518] sm:$0xff]
        %v410 = vld [vmem:[%s199 + $0x520] sm:$0xff]
        %v411 = vld [vmem:[%s199 + $0x528] sm:$0xff]
        %v412 = vld [vmem:[%s199 + $0x530] sm:$0xff]
        %v413 = vld [vmem:[%s199 + $0x538] sm:$0xff]
        %v414 = vld [vmem:[%s199 + $0x540] sm:$0xff]
        %v415 = vld [vmem:[%s199 + $0x548] sm:$0xff]
        %v416 = vld [vmem:[%s199 + $0x550] sm:$0xff]
        %v417 = vld [vmem:[%s199 + $0x558] sm:$0xff]
        %v418 = vld [vmem:[%s199 + $0x560] sm:$0xff]
        %v419 = vld [vmem:[%s199 + $0x568] sm:$0xff]
        %v420 = vld [vmem:[%s199 + $0x570] sm:$0xff]
        %v421 = vld [vmem:[%s199 + $0x578] sm:$0xff]
        %v422 = vld [vmem:[%s199 + $0x580] sm:$0xff]
        %v423 = vld [vmem:[%s199 + $0x588] sm:$0xff]
        %v424 = vld [vmem:[%s199 + $0x590] sm:$0xff]
        %v425 = vld [vmem:[%s199 + $0x598] sm:$0xff]
        %v426 = vld [vmem:[%s199 + $0x5a0] sm:$0xff]
        %v427 = vld [vmem:[%s199 + $0x5a8] sm:$0xff]
        %v428 = vld [vmem:[%s199 + $0x5b0] sm:$0xff]
        %v429 = vld [vmem:[%s199 + $0x5b8] sm:$0xff]
        %v430 = vld [vmem:[%s199 + $0x5c0] sm:$0xff]
        %v431 = vld [vmem:[%s199 + $0x5c8] sm:$0xff]
        %v432 = vld [vmem:[%s199 + $0x5d0] sm:$0xff]
        %v433 = vld [vmem:[%s199 + $0x5d8] sm:$0xff]
        %v434 = vld [vmem:[%s199 + $0x5e0] sm:$0xff]
        %v435 = vld [vmem:[%s199 + $0x5e8] sm:$0xff]
        %v436 = vld [vmem:[%s199 + $0x5f0] sm:$0xff]
        %v437 = vld [vmem:[%s199 + $0x5f8] sm:$0xff]
        %v438 = vld [vmem:[%s199 + $0x600] sm:$0xff]
        %v439 = vld [vmem:[%s199 + $0x608] sm:$0xff]
        %v440 = vld [vmem:[%s199 + $0x610] sm:$0xff]
        %v441 = vld [vmem:[%s199 + $0x618] sm:$0xff]
        %v442 = vld [vmem:[%s199 + $0x620] sm:$0xff]
        %v443 = vld [vmem:[%s199 + $0x628] sm:$0xff]
        %v444 = vld [vmem:[%s199 + $0x630] sm:$0xff]
        %v445 = vld [vmem:[%s199 + $0x638] sm:$0xff]
        %v446 = vld [vmem:[%s199 + $0x640] sm:$0xff]
        %v447 = vld [vmem:[%s199 + $0x648] sm:$0xff]
        %v448 = vld [vmem:[%s199 + $0x650] sm:$0xff]
        %v449 = vld [vmem:[%s199 + $0x658] sm:$0xff]
        %v450 = vld [vmem:[%s199 + $0x660] sm:$0xff]
        %v451 = vld [vmem:[%s199 + $0x668] sm:$0xff]
        %v452 = vld [vmem:[%s199 + $0x670] sm:$0xff]
        %v453 = vld [vmem:[%s199 + $0x678] sm:$0xff]
        %v454 = vld [vmem:[%s199 + $0x680] sm:$0xff]
        %v455 = vld [vmem:[%s199 + $0x688] sm:$0xff]
        %v456 = vld [vmem:[%s199 + $0x690] sm:$0xff]
        %v457 = vld [vmem:[%s199 + $0x698] sm:$0xff]
        %v458 = vld [vmem:[%s199 + $0x6a0] sm:$0xff]
        %v459 = vld [vmem:[%s199 + $0x6a8] sm:$0xff]
        %v460 = vld [vmem:[%s199 + $0x6b0] sm:$0xff]
        %v461 = vld [vmem:[%s199 + $0x6b8] sm:$0xff]
        %v462 = vld [vmem:[%s199 + $0x6c0] sm:$0xff]
        %v463 = vld [vmem:[%s199 + $0x6c8] sm:$0xff]
        %v464 = vld [vmem:[%s199 + $0x6d0] sm:$0xff]
        %v465 = vld [vmem:[%s199 + $0x6d8] sm:$0xff]
        %v466 = vld [vmem:[%s199 + $0x6e0] sm:$0xff]
        %v467 = vld [vmem:[%s199 + $0x6e8] sm:$0xff]
        %v468 = vld [vmem:[%s199 + $0x6f0] sm:$0xff]
        %v469 = vld [vmem:[%s199 + $0x6f8] sm:$0xff]
        %v470 = vld [vmem:[%s199 + $0x700] sm:$0xff]
        %v471 = vld [vmem:[%s199 + $0x708] sm:$0xff]
        %v472 = vld [vmem:[%s199 + $0x710] sm:$0xff]
        %v473 = vld [vmem:[%s199 + $0x718] sm:$0xff]
        %v474 = vld [vmem:[%s199 + $0x720] sm:$0xff]
        %v475 = vld [vmem:[%s199 + $0x728] sm:$0xff]
        %v476 = vld [vmem:[%s199 + $0x730] sm:$0xff]
        %v477 = vld [vmem:[%s199 + $0x738] sm:$0xff]
        %v478 = vld [vmem:[%s199 + $0x740] sm:$0xff]
        %v479 = vld [vmem:[%s199 + $0x748] sm:$0xff]
        %v480 = vld [vmem:[%s199 + $0x750] sm:$0xff]
        %v481 = vld [vmem:[%s199 + $0x758] sm:$0xff]
        %v482 = vld [vmem:[%s199 + $0x760] sm:$0xff]
        %v483 = vld [vmem:[%s199 + $0x768] sm:$0xff]
        %v484 = vld [vmem:[%s199 + $0x770] sm:$0xff]
        %v485 = vld [vmem:[%s199 + $0x778] sm:$0xff]
        %v486 = vld [vmem:[%s199 + $0x780] sm:$0xff]
        %v487 = vld [vmem:[%s199 + $0x788] sm:$0xff]
        %v488 = vld [vmem:[%s199 + $0x790] sm:$0xff]
        %v489 = vld [vmem:[%s199 + $0x798] sm:$0xff]
        %v490 = vld [vmem:[%s199 + $0x7a0] sm:$0xff]
        %v491 = vld [vmem:[%s199 + $0x7a8] sm:$0xff]
        %v492 = vld [vmem:[%s199 + $0x7b0] sm:$0xff]
        %v493 = vld [vmem:[%s199 + $0x7b8] sm:$0xff]
        %v494 = vld [vmem:[%s199 + $0x7c0] sm:$0xff]
        %v495 = vld [vmem:[%s199 + $0x7c8] sm:$0xff]
        %v496 = vld [vmem:[%s199 + $0x7d0] sm:$0xff]
        %v497 = vld [vmem:[%s199 + $0x7d8] sm:$0xff]
        %v498 = vld [vmem:[%s199 + $0x7e0] sm:$0xff]
        %v499 = vld [vmem:[%s199 + $0x7e8] sm:$0xff]
        %v500 = vld [vmem:[%s199 + $0x7f0] sm:$0xff]
        %v501 = vld [vmem:[%s199 + $0x7f8] sm:$0xff]
        %v502 = vld [vmem:[%s199 + $0x800] sm:$0xff]
        %v503 = vld [vmem:[%s199 + $0x808] sm:$0xff]
        %v504 = vld [vmem:[%s199 + $0x810] sm:$0xff]
        %v505 = vld [vmem:[%s199 + $0x818] sm:$0xff]
        %v506 = vld [vmem:[%s199 + $0x820] sm:$0xff]
        %v507 = vld [vmem:[%s199 + $0x828] sm:$0xff]
        %v508 = vld [vmem:[%s199 + $0x830] sm:$0xff]
        %v509 = vld [vmem:[%s199 + $0x838] sm:$0xff]
        %v510 = vld [vmem:[%s199 + $0x840] sm:$0xff]
        %v511 = vld [vmem:[%s199 + $0x848] sm:$0xff]
        %v512 = vld [vmem:[%s199 + $0x850] sm:$0xff]
        %v513 = vld [vmem:[%s199 + $0x858] sm:$0xff]
        %v514 = vld [vmem:[%s199 + $0x860] sm:$0xff]
        %v515 = vld [vmem:[%s199 + $0x868] sm:$0xff]
        %v516 = vld [vmem:[%s199 + $0x870] sm:$0xff]
        %v517 = vld [vmem:[%s199 + $0x878] sm:$0xff]
        %v518 = vld [vmem:[%s199 + $0x880] sm:$0xff]
        %v519 = vld [vmem:[%s199 + $0x888] sm:$0xff]
        %v520 = vld [vmem:[%s199 + $0x890] sm:$0xff]
        %v521 = vld [vmem:[%s199 + $0x898] sm:$0xff]
        %v522 = vld [vmem:[%s199 + $0x8a0] sm:$0xff]
        %v523 = vld [vmem:[%s199 + $0x8a8] sm:$0xff]
        %v524 = vld [vmem:[%s199 + $0x8b0] sm:$0xff]
        %v525 = vld [vmem:[%s199 + $0x8b8] sm:$0xff]
        %v526 = vld [vmem:[%s199 + $0x8c0] sm:$0xff]
        %v527 = vld [vmem:[%s199 + $0x8c8] sm:$0xff]
        %v528 = vld [vmem:[%s199 + $0x8d0] sm:$0xff]
        %v529 = vld [vmem:[%s199 + $0x8d8] sm:$0xff]
        %v530 = vld [vmem:[%s199 + $0x8e0] sm:$0xff]
        %v531 = vld [vmem:[%s199 + $0x8e8] sm:$0xff]
        %v532 = vld [vmem:[%s199 + $0x8f0] sm:$0xff]
        %v533 = vld [vmem:[%s199 + $0x8f8] sm:$0xff]
        %v534 = vld [vmem:[%s199 + $0x900] sm:$0xff]
        %v535 = vld [vmem:[%s199 + $0x908] sm:$0xff]
        %v536 = vld [vmem:[%s199 + $0x910] sm:$0xff]
        %v537 = vld [vmem:[%s199 + $0x918] sm:$0xff]
        %v538 = vld [vmem:[%s199 + $0x920] sm:$0xff]
        %v539 = vld [vmem:[%s199 + $0x928] sm:$0xff]
        %v540 = vld [vmem:[%s199 + $0x930] sm:$0xff]
        %v541 = vld [vmem:[%s199 + $0x938] sm:$0xff]
        %v542 = vld [vmem:[%s199 + $0x940] sm:$0xff]
        %v543 = vld [vmem:[%s199 + $0x948] sm:$0xff]
        %v544 = vld [vmem:[%s199 + $0x950] sm:$0xff]
        %v545 = vld [vmem:[%s199 + $0x958] sm:$0xff]
        %v546 = vld [vmem:[%s199 + $0x960] sm:$0xff]
        %v547 = vld [vmem:[%s199 + $0x968] sm:$0xff]
        %v548 = vld [vmem:[%s199 + $0x970] sm:$0xff]
        %v549 = vld [vmem:[%s199 + $0x978] sm:$0xff]
        %v550 = vld [vmem:[%s199 + $0x980] sm:$0xff]
        %v551 = vld [vmem:[%s199 + $0x988] sm:$0xff]
        %v552 = vld [vmem:[%s199 + $0x990] sm:$0xff]
        %v553 = vld [vmem:[%s199 + $0x998] sm:$0xff]
        %v554 = vld [vmem:[%s199 + $0x9a0] sm:$0xff]
        %v555 = vld [vmem:[%s199 + $0x9a8] sm:$0xff]
        %v556 = vld [vmem:[%s199 + $0x9b0] sm:$0xff]
        %v557 = vld [vmem:[%s199 + $0x9b8] sm:$0xff]
        %v558 = vld [vmem:[%s199 + $0x9c0] sm:$0xff]
        %v559 = vld [vmem:[%s199 + $0x9c8] sm:$0xff]
        %v560 = vld [vmem:[%s199 + $0x9d0] sm:$0xff]
        %v561 = vld [vmem:[%s199 + $0x9d8] sm:$0xff]
        %v562 = vld [vmem:[%s199 + $0x9e0] sm:$0xff]
        %v563 = vld [vmem:[%s199 + $0x9e8] sm:$0xff]
        %v564 = vld [vmem:[%s199 + $0x9f0] sm:$0xff]
        %v565 = vld [vmem:[%s199 + $0x9f8] sm:$0xff]
        %567 = vset.pattern.permute.xlu0 0
        %568 = vperm.xlu0 %567, %v244
        %v569 = vpop.permute.xlu0 %568
        %572 = vset.pattern.permute.xlu0 0
        %573 = vperm.xlu0 %572, %v245
        %v574 = vpop.permute.xlu0 %573
        %576 = vmatprep.subr.mxu0 %v247
        %577 = vmatpush1.msra.mxu0 %v246
        %578 = vmatprep.subr.mxu0 %v249
        %579 = vmatpush1.msra.mxu0 %v248
        %580 = vmatprep.subr.mxu0 %v251
        %581 = vmatpush1.msra.mxu0 %v250
        %582 = vmatprep.subr.mxu0 %v253
        %583 = vmatpush1.msra.mxu0 %v252
        %584 = vmatprep.subr.mxu0 %v255
        %585 = vmatpush1.msra.mxu0 %v254
        %586 = vmatprep.subr.mxu0 %v257
        %587 = vmatpush1.msra.mxu0 %v256
        %588 = vmatprep.subr.mxu0 %v259
        %589 = vmatpush1.msra.mxu0 %v258
        %590 = vmatprep.subr.mxu0 %v261
        %591 = vmatpush1.msra.mxu0 %v260
        %592 = vmatprep.subr.mxu0 %v263
        %593 = vmatpush1.msra.mxu0 %v262
        %594 = vmatprep.subr.mxu0 %v265
        %595 = vmatpush1.msra.mxu0 %v264
        %596 = vmatprep.subr.mxu0 %v267
        %597 = vmatpush1.msra.mxu0 %v266
        %598 = vmatprep.subr.mxu0 %v269
        %599 = vmatpush1.msra.mxu0 %v268
        %600 = vmatprep.subr.mxu0 %v271
        %601 = vmatpush1.msra.mxu0 %v270
        %602 = vmatprep.subr.mxu0 %v273
        %603 = vmatpush1.msra.mxu0 %v272
        %604 = vmatprep.subr.mxu0 %v275
        %605 = vmatpush1.msra.mxu0 %v274
        %606 = vmatprep.subr.mxu0 %v277
        %607 = vmatpush1.msra.mxu0 %v276
        %608 = vmatprep.subr.mxu0 %v279
        %609 = vmatpush1.msra.mxu0 %v278
        %610 = vmatprep.subr.mxu0 %v281
        %611 = vmatpush1.msra.mxu0 %v280
        %612 = vmatprep.subr.mxu0 %v283
        %613 = vmatpush1.msra.mxu0 %v282
        %614 = vmatprep.subr.mxu0 %v285
        %615 = vmatpush1.msra.mxu0 %v284
        %616 = vmatprep.subr.mxu0 %v287
        %617 = vmatpush1.msra.mxu0 %v286
        %618 = vmatprep.subr.mxu0 %v289
        %619 = vmatpush1.msra.mxu0 %v288
        %620 = vmatprep.subr.mxu0 %v291
        %621 = vmatpush1.msra.mxu0 %v290
        %622 = vmatprep.subr.mxu0 %v293
        %623 = vmatpush1.msra.mxu0 %v292
        %624 = vmatprep.subr.mxu0 %v295
        %625 = vmatpush1.msra.mxu0 %v294
        %626 = vmatprep.subr.mxu0 %v297
        %627 = vmatpush1.msra.mxu0 %v296
        %628 = vmatprep.subr.mxu0 %v299
        %629 = vmatpush1.msra.mxu0 %v298
        %630 = vmatprep.subr.mxu0 %v301
        %631 = vmatpush1.msra.mxu0 %v300
        %632 = vmatprep.subr.mxu0 %v303
        %633 = vmatpush1.msra.mxu0 %v302
        %634 = vmatprep.subr.mxu0 %v305
        %635 = vmatpush1.msra.mxu0 %v304
        %636 = vmatprep.subr.mxu0 %v307
        %637 = vmatpush1.msra.mxu0 %v306
        %638 = vmatprep.subr.mxu0 %v309
        %639 = vmatpush1.msra.mxu0 %v308
        %640 = vmatprep.mubr.f32.mxu0 %v225
        %641 = vmatmul.mubr.f32.gmra.mrb[0].mxu0 %v224
        %v642 = vpop.f32.mrb[0].mxu0
        %v643 = vadd.f32 %v569, %v642
        %v644 = vpop.f32.mrb[0].mxu0
        %v645 = vadd.f32 %v569, %v644
        %646 = vmatprep.mubr.f32.mxu0 %v235
        %647 = vmatmul.mubr.f32.gmra.mrb[0].mxu0 %v234
        %v648 = vpop.f32.mrb[0].mxu0
        %v649 = vadd.f32 %v574, %v648
        %v650 = vpop.f32.mrb[0].mxu0
        %v651 = vadd.f32 %v574, %v650
        %652 = vdwg.mxu0
        %653 = vmatprep.subr.mxu0 %v311
        %654 = vmatpush1.msra.mxu0 %v310
        %655 = vmatprep.subr.mxu0 %v313
        %656 = vmatpush1.msra.mxu0 %v312
        %657 = vmatprep.subr.mxu0 %v315
        %658 = vmatpush1.msra.mxu0 %v314
        %659 = vmatprep.subr.mxu0 %v317
        %660 = vmatpush1.msra.mxu0 %v316
        %661 = vmatprep.subr.mxu0 %v319
        %662 = vmatpush1.msra.mxu0 %v318
        %663 = vmatprep.subr.mxu0 %v321
        %664 = vmatpush1.msra.mxu0 %v320
        %665 = vmatprep.subr.mxu0 %v323
        %666 = vmatpush1.msra.mxu0 %v322
        %667 = vmatprep.subr.mxu0 %v325
        %668 = vmatpush1.msra.mxu0 %v324
        %669 = vmatprep.subr.mxu0 %v327
        %670 = vmatpush1.msra.mxu0 %v326
        %671 = vmatprep.subr.mxu0 %v329
        %672 = vmatpush1.msra.mxu0 %v328
        %673 = vmatprep.subr.mxu0 %v331
        %674 = vmatpush1.msra.mxu0 %v330
        %675 = vmatprep.subr.mxu0 %v333
        %676 = vmatpush1.msra.mxu0 %v332
        %677 = vmatprep.subr.mxu0 %v335
        %678 = vmatpush1.msra.mxu0 %v334
        %679 = vmatprep.subr.mxu0 %v337
        %680 = vmatpush1.msra.mxu0 %v336
        %681 = vmatprep.subr.mxu0 %v339
        %682 = vmatpush1.msra.mxu0 %v338
        %683 = vmatprep.subr.mxu0 %v341
        %684 = vmatpush1.msra.mxu0 %v340
        %685 = vmatprep.subr.mxu0 %v343
        %686 = vmatpush1.msra.mxu0 %v342
        %687 = vmatprep.subr.mxu0 %v345
        %688 = vmatpush1.msra.mxu0 %v344
        %689 = vmatprep.subr.mxu0 %v347
        %690 = vmatpush1.msra.mxu0 %v346
        %691 = vmatprep.subr.mxu0 %v349
        %692 = vmatpush1.msra.mxu0 %v348
        %693 = vmatprep.subr.mxu0 %v351
        %694 = vmatpush1.msra.mxu0 %v350
        %695 = vmatprep.subr.mxu0 %v353
        %696 = vmatpush1.msra.mxu0 %v352
        %697 = vmatprep.subr.mxu0 %v355
        %698 = vmatpush1.msra.mxu0 %v354
        %699 = vmatprep.subr.mxu0 %v357
        %700 = vmatpush1.msra.mxu0 %v356
        %701 = vmatprep.subr.mxu0 %v359
        %702 = vmatpush1.msra.mxu0 %v358
        %703 = vmatprep.subr.mxu0 %v361
        %704 = vmatpush1.msra.mxu0 %v360
        %705 = vmatprep.subr.mxu0 %v363
        %706 = vmatpush1.msra.mxu0 %v362
        %707 = vmatprep.subr.mxu0 %v365
        %708 = vmatpush1.msra.mxu0 %v364
        %709 = vmatprep.subr.mxu0 %v367
        %710 = vmatpush1.msra.mxu0 %v366
        %711 = vmatprep.subr.mxu0 %v369
        %712 = vmatpush1.msra.mxu0 %v368
        %713 = vmatprep.subr.mxu0 %v371
        %714 = vmatpush1.msra.mxu0 %v370
        %715 = vmatprep.subr.mxu0 %v373
        %716 = vmatpush1.msra.mxu0 %v372
        %717 = vmatprep.mubr.f32.mxu0 %v227
        %718 = vmatmul.mubr.f32.gmra.mrb[0].mxu0 %v226
        %v719 = vpop.f32.mrb[0].mxu0
        %v720 = vadd.f32 %v643, %v719
        %v721 = vpop.f32.mrb[0].mxu0
        %v722 = vadd.f32 %v645, %v721
        %723 = vmatprep.mubr.f32.mxu0 %v237
        %724 = vmatmul.mubr.f32.gmra.mrb[0].mxu0 %v236
        %v725 = vpop.f32.mrb[0].mxu0
        %v726 = vadd.f32 %v649, %v725
        %v727 = vpop.f32.mrb[0].mxu0
        %v728 = vadd.f32 %v651, %v727
        %729 = vdwg.mxu0
        %730 = vmatprep.subr.mxu0 %v375
        %731 = vmatpush1.msra.mxu0 %v374
        %732 = vmatprep.subr.mxu0 %v377
        %733 = vmatpush1.msra.mxu0 %v376
        %734 = vmatprep.subr.mxu0 %v379
        %735 = vmatpush1.msra.mxu0 %v378
        %736 = vmatprep.subr.mxu0 %v381
        %737 = vmatpush1.msra.mxu0 %v380
        %738 = vmatprep.subr.mxu0 %v383
        %739 = vmatpush1.msra.mxu0 %v382
        %740 = vmatprep.subr.mxu0 %v385
        %741 = vmatpush1.msra.mxu0 %v384
        %742 = vmatprep.subr.mxu0 %v387
        %743 = vmatpush1.msra.mxu0 %v386
        %744 = vmatprep.subr.mxu0 %v389
        %745 = vmatpush1.msra.mxu0 %v388
        %746 = vmatprep.subr.mxu0 %v391
        %747 = vmatpush1.msra.mxu0 %v390
        %748 = vmatprep.subr.mxu0 %v393
        %749 = vmatpush1.msra.mxu0 %v392
        %750 = vmatprep.subr.mxu0 %v395
        %751 = vmatpush1.msra.mxu0 %v394
        %752 = vmatprep.subr.mxu0 %v397
        %753 = vmatpush1.msra.mxu0 %v396
        %754 = vmatprep.subr.mxu0 %v399
        %755 = vmatpush1.msra.mxu0 %v398
        %756 = vmatprep.subr.mxu0 %v401
        %757 = vmatpush1.msra.mxu0 %v400
        %758 = vmatprep.subr.mxu0 %v403
        %759 = vmatpush1.msra.mxu0 %v402
        %760 = vmatprep.subr.mxu0 %v405
        %761 = vmatpush1.msra.mxu0 %v404
        %762 = vmatprep.subr.mxu0 %v407
        %763 = vmatpush1.msra.mxu0 %v406
        %764 = vmatprep.subr.mxu0 %v409
        %765 = vmatpush1.msra.mxu0 %v408
        %766 = vmatprep.subr.mxu0 %v411
        %767 = vmatpush1.msra.mxu0 %v410
        %768 = vmatprep.subr.mxu0 %v413
        %769 = vmatpush1.msra.mxu0 %v412
        %770 = vmatprep.subr.mxu0 %v415
        %771 = vmatpush1.msra.mxu0 %v414
        %772 = vmatprep.subr.mxu0 %v417
        %773 = vmatpush1.msra.mxu0 %v416
        %774 = vmatprep.subr.mxu0 %v419
        %775 = vmatpush1.msra.mxu0 %v418
        %776 = vmatprep.subr.mxu0 %v421
        %777 = vmatpush1.msra.mxu0 %v420
        %778 = vmatprep.subr.mxu0 %v423
        %779 = vmatpush1.msra.mxu0 %v422
        %780 = vmatprep.subr.mxu0 %v425
        %781 = vmatpush1.msra.mxu0 %v424
        %782 = vmatprep.subr.mxu0 %v427
        %783 = vmatpush1.msra.mxu0 %v426
        %784 = vmatprep.subr.mxu0 %v429
        %785 = vmatpush1.msra.mxu0 %v428
        %786 = vmatprep.subr.mxu0 %v431
        %787 = vmatpush1.msra.mxu0 %v430
        %788 = vmatprep.subr.mxu0 %v433
        %789 = vmatpush1.msra.mxu0 %v432
        %790 = vmatprep.subr.mxu0 %v435
        %791 = vmatpush1.msra.mxu0 %v434
        %792 = vmatprep.subr.mxu0 %v437
        %793 = vmatpush1.msra.mxu0 %v436
        %794 = vmatprep.mubr.f32.mxu0 %v229
        %795 = vmatmul.mubr.f32.gmra.mrb[0].mxu0 %v228
        %v796 = vpop.f32.mrb[0].mxu0
        %v797 = vadd.f32 %v720, %v796
        %v798 = vpop.f32.mrb[0].mxu0
        %v799 = vadd.f32 %v722, %v798
        %800 = vmatprep.mubr.f32.mxu0 %v239
        %801 = vmatmul.mubr.f32.gmra.mrb[0].mxu0 %v238
        %v802 = vpop.f32.mrb[0].mxu0
        %v803 = vadd.f32 %v726, %v802
        %v804 = vpop.f32.mrb[0].mxu0
        %v805 = vadd.f32 %v728, %v804
        %806 = vdwg.mxu0
        %807 = vmatprep.subr.mxu0 %v439
        %808 = vmatpush1.msra.mxu0 %v438
        %809 = vmatprep.subr.mxu0 %v441
        %810 = vmatpush1.msra.mxu0 %v440
        %811 = vmatprep.subr.mxu0 %v443
        %812 = vmatpush1.msra.mxu0 %v442
        %813 = vmatprep.subr.mxu0 %v445
        %814 = vmatpush1.msra.mxu0 %v444
        %815 = vmatprep.subr.mxu0 %v447
        %816 = vmatpush1.msra.mxu0 %v446
        %817 = vmatprep.subr.mxu0 %v449
        %818 = vmatpush1.msra.mxu0 %v448
        %819 = vmatprep.subr.mxu0 %v451
        %820 = vmatpush1.msra.mxu0 %v450
        %821 = vmatprep.subr.mxu0 %v453
        %822 = vmatpush1.msra.mxu0 %v452
        %823 = vmatprep.subr.mxu0 %v455
        %824 = vmatpush1.msra.mxu0 %v454
        %825 = vmatprep.subr.mxu0 %v457
        %826 = vmatpush1.msra.mxu0 %v456
        %827 = vmatprep.subr.mxu0 %v459
        %828 = vmatpush1.msra.mxu0 %v458
        %829 = vmatprep.subr.mxu0 %v461
        %830 = vmatpush1.msra.mxu0 %v460
        %831 = vmatprep.subr.mxu0 %v463
        %832 = vmatpush1.msra.mxu0 %v462
        %833 = vmatprep.subr.mxu0 %v465
        %834 = vmatpush1.msra.mxu0 %v464
        %835 = vmatprep.subr.mxu0 %v467
        %836 = vmatpush1.msra.mxu0 %v466
        %837 = vmatprep.subr.mxu0 %v469
        %838 = vmatpush1.msra.mxu0 %v468
        %839 = vmatprep.subr.mxu0 %v471
        %840 = vmatpush1.msra.mxu0 %v470
        %841 = vmatprep.subr.mxu0 %v473
        %842 = vmatpush1.msra.mxu0 %v472
        %843 = vmatprep.subr.mxu0 %v475
        %844 = vmatpush1.msra.mxu0 %v474
        %845 = vmatprep.subr.mxu0 %v477
        %846 = vmatpush1.msra.mxu0 %v476
        %847 = vmatprep.subr.mxu0 %v479
        %848 = vmatpush1.msra.mxu0 %v478
        %849 = vmatprep.subr.mxu0 %v481
        %850 = vmatpush1.msra.mxu0 %v480
        %851 = vmatprep.subr.mxu0 %v483
        %852 = vmatpush1.msra.mxu0 %v482
        %853 = vmatprep.subr.mxu0 %v485
        %854 = vmatpush1.msra.mxu0 %v484
        %855 = vmatprep.subr.mxu0 %v487
        %856 = vmatpush1.msra.mxu0 %v486
        %857 = vmatprep.subr.mxu0 %v489
        %858 = vmatpush1.msra.mxu0 %v488
        %859 = vmatprep.subr.mxu0 %v491
        %860 = vmatpush1.msra.mxu0 %v490
        %861 = vmatprep.subr.mxu0 %v493
        %862 = vmatpush1.msra.mxu0 %v492
        %863 = vmatprep.subr.mxu0 %v495
        %864 = vmatpush1.msra.mxu0 %v494
        %865 = vmatprep.subr.mxu0 %v497
        %866 = vmatpush1.msra.mxu0 %v496
        %867 = vmatprep.subr.mxu0 %v499
        %868 = vmatpush1.msra.mxu0 %v498
        %869 = vmatprep.subr.mxu0 %v501
        %870 = vmatpush1.msra.mxu0 %v500
        %871 = vmatprep.mubr.f32.mxu0 %v231
        %872 = vmatmul.mubr.f32.gmra.mrb[0].mxu0 %v230
        %v873 = vpop.f32.mrb[0].mxu0
        %v874 = vadd.f32 %v797, %v873
        %v875 = vpop.f32.mrb[0].mxu0
        %v876 = vadd.f32 %v799, %v875
        %877 = vmatprep.mubr.f32.mxu0 %v241
        %878 = vmatmul.mubr.f32.gmra.mrb[0].mxu0 %v240
        %v879 = vpop.f32.mrb[0].mxu0
        %v880 = vadd.f32 %v803, %v879
        %v881 = vpop.f32.mrb[0].mxu0
        %v882 = vadd.f32 %v805, %v881
        %883 = vdwg.mxu0
        %884 = vmatprep.subr.mxu0 %v503
        %885 = vmatpush1.msra.mxu0 %v502
        %886 = vmatprep.subr.mxu0 %v505
        %887 = vmatpush1.msra.mxu0 %v504
        %888 = vmatprep.subr.mxu0 %v507
        %889 = vmatpush1.msra.mxu0 %v506
        %890 = vmatprep.subr.mxu0 %v509
        %891 = vmatpush1.msra.mxu0 %v508
        %892 = vmatprep.subr.mxu0 %v511
        %893 = vmatpush1.msra.mxu0 %v510
        %894 = vmatprep.subr.mxu0 %v513
        %895 = vmatpush1.msra.mxu0 %v512
        %896 = vmatprep.subr.mxu0 %v515
        %897 = vmatpush1.msra.mxu0 %v514
        %898 = vmatprep.subr.mxu0 %v517
        %899 = vmatpush1.msra.mxu0 %v516
        %900 = vmatprep.subr.mxu0 %v519
        %901 = vmatpush1.msra.mxu0 %v518
        %902 = vmatprep.subr.mxu0 %v521
        %903 = vmatpush1.msra.mxu0 %v520
        %904 = vmatprep.subr.mxu0 %v523
        %905 = vmatpush1.msra.mxu0 %v522
        %906 = vmatprep.subr.mxu0 %v525
        %907 = vmatpush1.msra.mxu0 %v524
        %908 = vmatprep.subr.mxu0 %v527
        %909 = vmatpush1.msra.mxu0 %v526
        %910 = vmatprep.subr.mxu0 %v529
        %911 = vmatpush1.msra.mxu0 %v528
        %912 = vmatprep.subr.mxu0 %v531
        %913 = vmatpush1.msra.mxu0 %v530
        %914 = vmatprep.subr.mxu0 %v533
        %915 = vmatpush1.msra.mxu0 %v532
        %916 = vmatprep.subr.mxu0 %v535
        %917 = vmatpush1.msra.mxu0 %v534
        %918 = vmatprep.subr.mxu0 %v537
        %919 = vmatpush1.msra.mxu0 %v536
        %920 = vmatprep.subr.mxu0 %v539
        %921 = vmatpush1.msra.mxu0 %v538
        %922 = vmatprep.subr.mxu0 %v541
        %923 = vmatpush1.msra.mxu0 %v540
        %924 = vmatprep.subr.mxu0 %v543
        %925 = vmatpush1.msra.mxu0 %v542
        %926 = vmatprep.subr.mxu0 %v545
        %927 = vmatpush1.msra.mxu0 %v544
        %928 = vmatprep.subr.mxu0 %v547
        %929 = vmatpush1.msra.mxu0 %v546
        %930 = vmatprep.subr.mxu0 %v549
        %931 = vmatpush1.msra.mxu0 %v548
        %932 = vmatprep.subr.mxu0 %v551
        %933 = vmatpush1.msra.mxu0 %v550
        %934 = vmatprep.subr.mxu0 %v553
        %935 = vmatpush1.msra.mxu0 %v552
        %936 = vmatprep.subr.mxu0 %v555
        %937 = vmatpush1.msra.mxu0 %v554
        %938 = vmatprep.subr.mxu0 %v557
        %939 = vmatpush1.msra.mxu0 %v556
        %940 = vmatprep.subr.mxu0 %v559
        %941 = vmatpush1.msra.mxu0 %v558
        %942 = vmatprep.subr.mxu0 %v561
        %943 = vmatpush1.msra.mxu0 %v560
        %944 = vmatprep.subr.mxu0 %v563
        %945 = vmatpush1.msra.mxu0 %v562
        %946 = vmatprep.subr.mxu0 %v565
        %947 = vmatpush1.msra.mxu0 %v564
        %948 = vmatprep.mubr.f32.mxu0 %v233
        %949 = vmatmul.mubr.f32.gmra.mrb[0].mxu0 %v232
        %v950 = vpop.f32.mrb[0].mxu0
        %v951 = vadd.f32 %v874, %v950
        %v952 = vpop.f32.mrb[0].mxu0
        %v953 = vadd.f32 %v876, %v952
        %954 = vmatprep.mubr.f32.mxu0 %v243
        %955 = vmatmul.mubr.f32.gmra.mrb[0].mxu0 %v242
        %v956 = vpop.f32.mrb[0].mxu0
        %v957 = vadd.f32 %v880, %v956
        %v958 = vpop.f32.mrb[0].mxu0
        %v959 = vadd.f32 %v882, %v958
        %960 = vdwg.mxu0
        %961 = vst [vmem:[%s221] sm:$0xff] %v951
        %962 = vst [vmem:[%s221 + $0x8] sm:$0xff] %v953
        %963 = vst [vmem:[%s221 + $0x10] sm:$0xff] %v957
        %964 = vst [vmem:[%s221 + $0x18] sm:$0xff] %v959
        %s965 = sand.u32 %s113, 1
        %s966 = scalar_lea.sflag [#allocation4], %s965
        %s967 = sand.u32 %s113, 1
        %s968 = smul.addr %s967, 32
        %s969 = scalar_lea.vmem [#allocation7], %s968
        // Predicated region
        $region41: #{tpu_custom_call.1} parent=31 // pred_check
          %p970 = pneg %p123
        $region42: #{tpu_custom_call.1} parent=31 // pred_check_branch
          %972 = sbr.rel (%p970) target = $region44
        $region43: #{tpu_custom_call.1} parent=31 // pred_region
          %s973 = smul.u32 2, %s26
          %s975 = ssub.s32 512, 512
          %976 = vsyncadd %s966, %s975
          %s977 = smul.addr %s25, 4
          %s978 = sadd.s32 %s973, %s977
          %s979 = smul.addr %s978, 128
          %s980 = scalar_lea.hbm %s3, %s979
          %s981 = sshll.u32 %s969, 4
          %s982 = int_to_ptr.vmem [resolvable:$true] %s981
          %987 = dma.vmem_to_hbm [thread:$0]  %s982, 512, %s980, %s966, 256, 256, 16
        $region44: #{tpu_custom_call.1} parent=31 // pred_fallthru
          _
      $region32: #{tpu_custom_call.1} parent=5 // pred_fallthru
        _
      %p988 = scmp.le.s32.totalorder 2, %s16
      // Predicated region
      $region45: #{tpu_custom_call.1} parent=5 // pred_check
        %p989 = pneg %p988
      $region46: #{tpu_custom_call.1} parent=5 // pred_check_branch
        %991 = sbr.rel (%p989) target = $region48
      $region47: #{tpu_custom_call.1} parent=5 // pred_region
        %s992 = ssub.s32 %s16, 2
        // Predicated region
        $region49: #{tpu_custom_call.1} parent=47 // pred_check
          %p993 = pneg %p129
        $region50: #{tpu_custom_call.1} parent=47 // pred_check_branch
          %995 = sbr.rel (%p993) target = $region52
        $region51: #{tpu_custom_call.1} parent=47 // pred_region
          %s996 = sand.u32 %s114, 1
          %s997 = scalar_lea.sflag [#allocation4], %s996
          %s998 = sand.u32 %s114, 1
          %s999 = smul.addr %s998, 32
          %s1000 = scalar_lea.vmem [#allocation7], %s999
          %1001 = dma.done %s997, 512
        $region52: #{tpu_custom_call.1} parent=47 // pred_fallthru
          _
      $region48: #{tpu_custom_call.1} parent=5 // pred_fallthru
        _
    $region6: #{tpu_custom_call.1} parent=1 // loop_footer
      %s20 = sadd.s32 1, %s16
    $region7: #{tpu_custom_call.1} parent=1 // loop_footer_branch
      %15 = sbr.rel target = $region3
    $region8: #{tpu_custom_call.1} parent=1 // loop_exit
      _
    %1002 = vsyncpa [#allocation3], 1
    %s1003 = scalar_lea.sflag [#allocation3], 1
    %1004 = vsyncpa %s1003, 1
    %1005 = vsyncpa [#allocation6], 1
    %s1006 = scalar_lea.sflag [#allocation6], 1
    %1007 = vsyncpa %s1006, 1
    %1008 = vsyncpa [#allocation4], 1
    %s1009 = scalar_lea.sflag [#allocation4], 1
    %1010 = vsyncpa %s1009, 1

</llo_original>
